<compile_context>
chip_gen: v5e
topology: v5e:2x2
jax: 0.10.0
libtpu: 0.0.40
codegen_flags: <defaults>
</compile_context>

<pallas_src>
import jax
import jax.numpy as jnp
from jax.experimental import pallas as pl
from jax.experimental.pallas import tpu as pltpu

BN_EPS = 1e-5


# ----------------------------------------------------------------------------- kernel
def _bc_kernel(x_ref, w1_ref, b1_ref, w2_ref, b2_ref, wd_ref, bd_ref, wo_ref, bo_ref,
               o_ref):
    x = x_ref[...].astype(jnp.float32)

    h = jnp.dot(x, w1_ref[...], preferred_element_type=jnp.float32) + b1_ref[...]
    h = jnp.maximum(h, 0.0)

    h = jnp.dot(h, w2_ref[...], preferred_element_type=jnp.float32) + b2_ref[...]
    h = jnp.maximum(h, 0.0)

    h = jnp.dot(h, wd_ref[...], preferred_element_type=jnp.float32) + bd_ref[...]
    h = jnp.maximum(h, 0.0)

    # dropout: eval-mode identity.
    # TODO(synk): training-mode stochastic dropout / batch-stat BN not implemented.

    out = jnp.dot(h, wo_ref[...], preferred_element_type=jnp.float32) + bo_ref[...]
    o_ref[...] = out.astype(o_ref.dtype)


# -------------------------------------------------------------------- parameter folding
def fold_params(params):
    """Fold eval-mode BatchNorms into adjacent Linears and compose the deep chain."""
    # batchnorm1 -> layer_2
    s1 = params["bn1_gamma"] * jax.lax.rsqrt(params["bn1_var"] + BN_EPS)   # (1, H)
    t1 = params["bn1_beta"] - params["bn1_mean"] * s1                      # (1, H)
    w2 = s1.reshape(-1, 1) * params["w2"]
    b2 = t1 @ params["w2"] + params["b2"]

    # deep_layers: no activation between members -> one affine map.
    n_deep = int(params["w_deep"].shape[0])
    H = params["w2"].shape[1]
    wd = jnp.eye(H, dtype=jnp.float32)
    bd = jnp.zeros((1, H), jnp.float32)
    for i in range(n_deep):
        bd = bd @ params["w_deep"][i] + params["b_deep"][i]
        wd = wd @ params["w_deep"][i]

    # batchnorm2 -> layer_out
    s2 = params["bn2_gamma"] * jax.lax.rsqrt(params["bn2_var"] + BN_EPS)
    t2 = params["bn2_beta"] - params["bn2_mean"] * s2
    wo = s2.reshape(-1, 1) * params["w_out"]
    bo = t2 @ params["w_out"] + params["b_out"]

    return dict(w1=params["w1"], b1=params["b1"],
                w2=w2, b2=b2, wd=wd, bd=bd, wo=wo, bo=bo)


# --------------------------------------------------------------------------- wrapper
def binary_classification_forward(x, params, *, tm=512):
    """x: [B, column_length] float32.  Returns logits [B, 1] float32."""
    fp = fold_params(params)
    B, C = x.shape

    # Batch tile: single step for small B, 512-row tiles (pipelined, core-parallel)
    # for large B.  Pad B to a multiple of TM if needed.
    TM = B if B <= tm else tm
    pad = (-B) % TM
    xp = jnp.pad(x, ((0, pad), (0, 0))) if pad else x
    Bp = xp.shape[0]

    # TODO(synk): for large-B inference on v6e/v7x, cast x/weights to bf16 (keep f32 accum).
    args = (xp,
            fp["w1"], fp["b1"],
            fp["w2"], fp["b2"],
            fp["wd"], fp["bd"],
            fp["wo"], fp["bo"])

    def resident(a):  # full-array VMEM-resident operand (constant block index)
        return pl.BlockSpec(a.shape, lambda i: (0, 0))

    in_specs = [pl.BlockSpec((TM, C), lambda i: (i, 0))] + [resident(a) for a in args[1:]]
    out_spec = pl.BlockSpec((TM, 1), lambda i: (i, 0))

    out = pl.pallas_call(
        _bc_kernel,
        out_shape=jax.ShapeDtypeStruct((Bp, 1), jnp.float32),
        grid=(Bp // TM,),
        in_specs=in_specs,
        out_specs=out_spec,
        compiler_params=pltpu.CompilerParams(dimension_semantics=("parallel",)),
    )(*args)

    return out[:B] if pad else out


# ------------------------------------------------------------------------ param init
def init_params(key, column_length, hidden, n_deep):
    """Deterministic synthetic init mimicking PyTorch Linear/BatchNorm shapes.
    Linear weights are stored transposed: [in, out]; biases as [1, out]."""
    keys = jax.random.split(key, 16)

    def lin(kw, kb, fan_in, fan_out):
        bound = 1.0 / jnp.sqrt(fan_in)
        w = jax.random.uniform(kw, (fan_in, fan_out), jnp.float32, -bound, bound)
        b = jax.random.uniform(kb, (1, fan_out), jnp.float32, -bound, bound)
        return w, b

    w1, b1 = lin(keys[0], keys[1], column_length, hidden)
    w2, b2 = lin(keys[2], keys[3], hidden, hidden)

    wd_list, bd_list = [], []
    dkeys = jax.random.split(keys[4], 2 * max(n_deep, 1))
    for i in range(n_deep):
        w, b = lin(dkeys[2 * i], dkeys[2 * i + 1], hidden, hidden)
        wd_list.append(w)
        bd_list.append(b)
    w_deep = jnp.stack(wd_list, 0) if n_deep > 0 else jnp.zeros((0, hidden, hidden), jnp.float32)
    b_deep = jnp.stack(bd_list, 0) if n_deep > 0 else jnp.zeros((0, 1, hidden), jnp.float32)

    w_out, b_out = lin(keys[5], keys[6], hidden, 1)

    bn1_gamma = 1.0 + 0.1 * jax.random.normal(keys[7], (1, hidden), jnp.float32)
    bn1_beta = 0.1 * jax.random.normal(keys[8], (1, hidden), jnp.float32)
    bn1_mean = 0.1 * jax.random.normal(keys[9], (1, hidden), jnp.float32)
    bn1_var = jax.random.uniform(keys[10], (1, hidden), jnp.float32, 0.5, 1.5)

    bn2_gamma = 1.0 + 0.1 * jax.random.normal(keys[11], (1, hidden), jnp.float32)
    bn2_beta = 0.1 * jax.random.normal(keys[12], (1, hidden), jnp.float32)
    bn2_mean = 0.1 * jax.random.normal(keys[13], (1, hidden), jnp.float32)
    bn2_var = jax.random.uniform(keys[14], (1, hidden), jnp.float32, 0.5, 1.5)

    return dict(
        w1=w1, b1=b1, w2=w2, b2=b2,
        w_deep=w_deep, b_deep=b_deep,
        w_out=w_out, b_out=b_out,
        bn1_gamma=bn1_gamma, bn1_beta=bn1_beta, bn1_mean=bn1_mean, bn1_var=bn1_var,
        bn2_gamma=bn2_gamma, bn2_beta=bn2_beta, bn2_mean=bn2_mean, bn2_var=bn2_var,
    )


# -------------------------------------------------------------------------- reference
def _reference_forward(x, params):
    """Pure-JAX reference (un-folded) as the oracle."""
    h = jnp.maximum(x @ params["w1"] + params["b1"], 0.0)
    h = (h - params["bn1_mean"]) * jax.lax.rsqrt(params["bn1_var"] + BN_EPS) \
        * params["bn1_gamma"] + params["bn1_beta"]
    h = jnp.maximum(h @ params["w2"] + params["b2"], 0.0)
    for i in range(params["w_deep"].shape[0]):
        h = h @ params["w_deep"][i] + params["b_deep"][i]
    h = jnp.maximum(h, 0.0)
    h = (h - params["bn2_mean"]) * jax.lax.rsqrt(params["bn2_var"] + BN_EPS) \
        * params["bn2_gamma"] + params["bn2_beta"]
    return h @ params["w_out"] + params["b_out"]


if __name__ == "__main__":
    # Module hyperparameters (small, consistent with the PyTorch __init__):
    column_length = 16     # input feature dim
    hidden = 32            # "batch_size" ctor arg == hidden width
    deep_layers_1 = 2
    batch = 8              # number of samples fed through forward()

    key = jax.random.PRNGKey(0)
    k_x, k_p = jax.random.split(key)

    x = jax.random.normal(k_x, (batch, column_length), jnp.float32)
    params = init_params(k_p, column_length, hidden, deep_layers_1)

    out = jax.block_until_ready(binary_classification_forward(x, params))
    ref = _reference_forward(x, params)
    assert out.shape == (batch, 1), out.shape
    assert jnp.allclose(out, ref, atol=1e-4, rtol=1e-4), (out, ref)

    # Also exercise the n_deep == 0 case (deep chain folds to identity; no zero-sized refs).
    params0 = init_params(k_p, column_length, hidden, 0)
    out0 = jax.block_until_ready(binary_classification_forward(x, params0))
    ref0 = _reference_forward(x, params0)
    assert jnp.allclose(out0, ref0, atol=1e-4, rtol=1e-4), (out0, ref0)

    print("KERNEL_OK")
</pallas_src>

<mosaic_0001>
module attributes {stable_mosaic.version = 11 : i64} {
  func.func @_bc_kernel(%arg0: i32, %arg1: memref<8x16xf32, #tpu.memory_space<vmem>>, %arg2: memref<16x32xf32, #tpu.memory_space<vmem>>, %arg3: memref<1x32xf32, #tpu.memory_space<vmem>>, %arg4: memref<32x32xf32, #tpu.memory_space<vmem>>, %arg5: memref<1x32xf32, #tpu.memory_space<vmem>>, %arg6: memref<32x32xf32, #tpu.memory_space<vmem>>, %arg7: memref<1x32xf32, #tpu.memory_space<vmem>>, %arg8: memref<32x1xf32, #tpu.memory_space<vmem>>, %arg9: memref<1x1xf32, #tpu.memory_space<vmem>>, %arg10: memref<8x1xf32, #tpu.memory_space<vmem>>) attributes {dimension_semantics = [#tpu.dimension_semantics<parallel>], iteration_bounds = array<i64: 1>, scalar_prefetch = 0 : i64, scratch_operands = 0 : i64, tpu.core_type = #tpu.core_type<tc>, window_params = [{transform_indices = @transform_0, window_bounds = array<i64: 8, 16>}, {pipeline_mode = #tpu.pipeline_mode<synchronous>, transform_indices = @transform_1, window_bounds = array<i64: 16, 32>}, {pipeline_mode = #tpu.pipeline_mode<synchronous>, transform_indices = @transform_2, window_bounds = array<i64: 1, 32>}, {pipeline_mode = #tpu.pipeline_mode<synchronous>, transform_indices = @transform_3, window_bounds = array<i64: 32, 32>}, {pipeline_mode = #tpu.pipeline_mode<synchronous>, transform_indices = @transform_4, window_bounds = array<i64: 1, 32>}, {pipeline_mode = #tpu.pipeline_mode<synchronous>, transform_indices = @transform_5, window_bounds = array<i64: 32, 32>}, {pipeline_mode = #tpu.pipeline_mode<synchronous>, transform_indices = @transform_6, window_bounds = array<i64: 1, 32>}, {pipeline_mode = #tpu.pipeline_mode<synchronous>, transform_indices = @transform_7, window_bounds = array<i64: 32, 1>}, {pipeline_mode = #tpu.pipeline_mode<synchronous>, transform_indices = @transform_8, window_bounds = array<i64: 1, 1>}, {transform_indices = @transform_9, window_bounds = array<i64: 8, 1>}]} {
    %c0 = arith.constant 0 : index
    %c0_0 = arith.constant 0 : index
    %0 = vector.load %arg1[%c0, %c0_0] : memref<8x16xf32, #tpu.memory_space<vmem>>, vector<8x16xf32>
    %c0_1 = arith.constant 0 : index
    %c0_2 = arith.constant 0 : index
    %1 = vector.load %arg2[%c0_1, %c0_2] : memref<16x32xf32, #tpu.memory_space<vmem>>, vector<16x32xf32>
    %cst = arith.constant dense<0.000000e+00> : vector<8x32xf32>
    %2 = tpu.matmul %0, %1, %cst {dimension_numbers = #tpu.dot_dimension_numbers<[1], [0], [0], [1], [0, 0, 1, 1], [], []>} : vector<8x16xf32>, vector<16x32xf32>, vector<8x32xf32> -> vector<8x32xf32>
    %c0_3 = arith.constant 0 : index
    %c0_4 = arith.constant 0 : index
    %3 = vector.load %arg3[%c0_3, %c0_4] : memref<1x32xf32, #tpu.memory_space<vmem>>, vector<1x32xf32>
    %4 = vector.broadcast %3 : vector<1x32xf32> to vector<8x32xf32>
    %5 = arith.addf %2, %4 : vector<8x32xf32>
    %cst_5 = arith.constant 0.000000e+00 : f32
    %6 = vector.broadcast %cst_5 : f32 to vector<8x32xf32>
    %7 = arith.maximumf %5, %6 : vector<8x32xf32>
    %c0_6 = arith.constant 0 : index
    %c0_7 = arith.constant 0 : index
    %8 = vector.load %arg4[%c0_6, %c0_7] : memref<32x32xf32, #tpu.memory_space<vmem>>, vector<32x32xf32>
    %cst_8 = arith.constant dense<0.000000e+00> : vector<8x32xf32>
    %9 = tpu.matmul %7, %8, %cst_8 {dimension_numbers = #tpu.dot_dimension_numbers<[1], [0], [0], [1], [0, 0, 1, 1], [], []>} : vector<8x32xf32>, vector<32x32xf32>, vector<8x32xf32> -> vector<8x32xf32>
    %c0_9 = arith.constant 0 : index
    %c0_10 = arith.constant 0 : index
    %10 = vector.load %arg5[%c0_9, %c0_10] : memref<1x32xf32, #tpu.memory_space<vmem>>, vector<1x32xf32>
    %11 = vector.broadcast %10 : vector<1x32xf32> to vector<8x32xf32>
    %12 = arith.addf %9, %11 : vector<8x32xf32>
    %cst_11 = arith.constant 0.000000e+00 : f32
    %13 = vector.broadcast %cst_11 : f32 to vector<8x32xf32>
    %14 = arith.maximumf %12, %13 : vector<8x32xf32>
    %c0_12 = arith.constant 0 : index
    %c0_13 = arith.constant 0 : index
    %15 = vector.load %arg6[%c0_12, %c0_13] : memref<32x32xf32, #tpu.memory_space<vmem>>, vector<32x32xf32>
    %cst_14 = arith.constant dense<0.000000e+00> : vector<8x32xf32>
    %16 = tpu.matmul %14, %15, %cst_14 {dimension_numbers = #tpu.dot_dimension_numbers<[1], [0], [0], [1], [0, 0, 1, 1], [], []>} : vector<8x32xf32>, vector<32x32xf32>, vector<8x32xf32> -> vector<8x32xf32>
    %c0_15 = arith.constant 0 : index
    %c0_16 = arith.constant 0 : index
    %17 = vector.load %arg7[%c0_15, %c0_16] : memref<1x32xf32, #tpu.memory_space<vmem>>, vector<1x32xf32>
    %18 = vector.broadcast %17 : vector<1x32xf32> to vector<8x32xf32>
    %19 = arith.addf %16, %18 : vector<8x32xf32>
    %cst_17 = arith.constant 0.000000e+00 : f32
    %20 = vector.broadcast %cst_17 : f32 to vector<8x32xf32>
    %21 = arith.maximumf %19, %20 : vector<8x32xf32>
    %c0_18 = arith.constant 0 : index
    %c0_19 = arith.constant 0 : index
    %22 = vector.load %arg8[%c0_18, %c0_19] : memref<32x1xf32, #tpu.memory_space<vmem>>, vector<32x1xf32>
    %cst_20 = arith.constant dense<0.000000e+00> : vector<8x1xf32>
    %23 = tpu.matmul %21, %22, %cst_20 {dimension_numbers = #tpu.dot_dimension_numbers<[1], [0], [0], [1], [0, 0, 1, 1], [], []>} : vector<8x32xf32>, vector<32x1xf32>, vector<8x1xf32> -> vector<8x1xf32>
    %c0_21 = arith.constant 0 : index
    %c0_22 = arith.constant 0 : index
    %24 = vector.load %arg9[%c0_21, %c0_22] : memref<1x1xf32, #tpu.memory_space<vmem>>, vector<1x1xf32>
    %25 = vector.broadcast %24 : vector<1x1xf32> to vector<8x1xf32>
    %26 = arith.addf %23, %25 : vector<8x1xf32>
    %c0_23 = arith.constant 0 : index
    %c0_24 = arith.constant 0 : index
    %27 = vector.load %arg10[%c0_23, %c0_24] : memref<8x1xf32, #tpu.memory_space<vmem>>, vector<8x1xf32>
    tpu.vector_store %arg10[%c0_23, %c0_24], %26 {strides = array<i32>} : memref<8x1xf32, #tpu.memory_space<vmem>>, vector<8x1xf32>,
    return
  }
  func.func @transform_0(%arg0: i32) -> (i32, i32) {
    %c0_i32 = arith.constant 0 : i32
    %c0_i32_0 = arith.constant 0 : i32
    return %arg0, %c0_i32 : i32, i32
  }
  func.func @transform_1(%arg0: i32) -> (i32, i32) {
    %c0_i32 = arith.constant 0 : i32
    %c0_i32_0 = arith.constant 0 : i32
    %c0_i32_1 = arith.constant 0 : i32
    return %c0_i32, %c0_i32_0 : i32, i32
  }
  func.func @transform_2(%arg0: i32) -> (i32, i32) {
    %c0_i32 = arith.constant 0 : i32
    %c0_i32_0 = arith.constant 0 : i32
    %c0_i32_1 = arith.constant 0 : i32
    return %c0_i32, %c0_i32_0 : i32, i32
  }
  func.func @transform_3(%arg0: i32) -> (i32, i32) {
    %c0_i32 = arith.constant 0 : i32
    %c0_i32_0 = arith.constant 0 : i32
    %c0_i32_1 = arith.constant 0 : i32
    return %c0_i32, %c0_i32_0 : i32, i32
  }
  func.func @transform_4(%arg0: i32) -> (i32, i32) {
    %c0_i32 = arith.constant 0 : i32
    %c0_i32_0 = arith.constant 0 : i32
    %c0_i32_1 = arith.constant 0 : i32
    return %c0_i32, %c0_i32_0 : i32, i32
  }
  func.func @transform_5(%arg0: i32) -> (i32, i32) {
    %c0_i32 = arith.constant 0 : i32
    %c0_i32_0 = arith.constant 0 : i32
    %c0_i32_1 = arith.constant 0 : i32
    return %c0_i32, %c0_i32_0 : i32, i32
  }
  func.func @transform_6(%arg0: i32) -> (i32, i32) {
    %c0_i32 = arith.constant 0 : i32
    %c0_i32_0 = arith.constant 0 : i32
    %c0_i32_1 = arith.constant 0 : i32
    return %c0_i32, %c0_i32_0 : i32, i32
  }
  func.func @transform_7(%arg0: i32) -> (i32, i32) {
    %c0_i32 = arith.constant 0 : i32
    %c0_i32_0 = arith.constant 0 : i32
    %c0_i32_1 = arith.constant 0 : i32
    return %c0_i32, %c0_i32_0 : i32, i32
  }
  func.func @transform_8(%arg0: i32) -> (i32, i32) {
    %c0_i32 = arith.constant 0 : i32
    %c0_i32_0 = arith.constant 0 : i32
    %c0_i32_1 = arith.constant 0 : i32
    return %c0_i32, %c0_i32_0 : i32, i32
  }
  func.func @transform_9(%arg0: i32) -> (i32, i32) {
    %c0_i32 = arith.constant 0 : i32
    %c0_i32_0 = arith.constant 0 : i32
    return %arg0, %c0_i32 : i32, i32
  }
}

</mosaic_0001>

<llo_original>
// kernel: tpu_custom_call.1
$region0: #{tpu_custom_call.1}
  #allocation0 [shape = 'u32[]', space=smem, size = 0x4, offset = 0x4, fixed_abs, tag = 'smem constant byte address 0x4 - core index']
  #allocation1 [shape = 'u32[72,128]{1,0:T(1,128)}', space=vmem, size = 0x9000, scoped, tag = 'internal scratch']
  #allocation2 [shape = 'f32[1,1]{1,0:T(1,128)S(1)}', space=vmem, size = 0x200, scoped, tag = 'scoped memory for tpu_custom_call.1']
  %s0 = inlined_call_operand.hbm [shape: f32[8,16], index: 0, kind: input, shape index: {}]
  %s1 = inlined_call_operand.hbm [shape: f32[16,32], index: 1, kind: input, shape index: {}]
  %s2 = inlined_call_operand.vmem [shape: f32[1,32], index: 2, kind: input, shape index: {}]
  %s3 = inlined_call_operand.vmem [shape: f32[32,32], index: 3, kind: input, shape index: {}]
  %s4 = inlined_call_operand.vmem [shape: f32[1,32], index: 4, kind: input, shape index: {}]
  %s5 = inlined_call_operand.hbm [shape: f32[32,32], index: 5, kind: input, shape index: {}]
  %s6 = inlined_call_operand.vmem [shape: f32[1,32], index: 6, kind: input, shape index: {}]
  %s7 = inlined_call_operand.vmem [shape: f32[32,1], index: 7, kind: input, shape index: {}]
  %s8 = inlined_call_operand.<no memory space> [shape: f32[1,1], index: 8, kind: input, shape index: {}]
  %s9 = inlined_call_operand.vmem [shape: f32[8,1], index: 9, kind: output, shape index: {}]
  %s10 = sld [smem:[#allocation0]]
  $region58: #{tpu_custom_call.1} parent=0
    _
  %s12 = ssub.s32 1, %s10
  %s13 = scalar_select 0, %s12, %s10
  %v14 = vstv %s8
  %15 = vst [vmem:[#allocation2] sm:$0x1] %v14
  $region1: #{tpu_custom_call.1} parent=0
    #allocation3 [shape = 'u8[4096]{0}', space=vmem, size = 0x1000, scoped, tag = 'input window, operand 0, single buffered']
    #allocation4 [shape = 's32[1]{0}', space=sflag, size = 0x4, scoped, tag = 'scoped memory for tpu_custom_call.1']
    #allocation5 [shape = 'u8[8192]{0}', space=vmem, size = 0x2000, scoped, tag = 'input window, operand 1, single buffered']
    #allocation6 [shape = 's32[1]{0}', space=sflag, size = 0x4, scoped, tag = 'scoped memory for tpu_custom_call.1']
    #allocation7 [shape = 'u8[16384]{0}', space=vmem, size = 0x4000, scoped, tag = 'input window, operand 5, single buffered']
    %16 = vsyncpa [#allocation4], 0
    %17 = vsyncpa [#allocation6], 0
    // Predicated region
    $region2: #{tpu_custom_call.1} parent=1 // pred_check
      _
    $region3: #{tpu_custom_call.1} parent=1 // pred_check_branch
      %19 = sbr.rel (0) target = $region5
    $region4: #{tpu_custom_call.1} parent=1 // pred_region
      %21 = vsyncadd [#allocation4], 0
      %s23 = sshll.u32 %s0, 4
      %s24 = int_to_ptr.hbm [resolvable:$true] %s23
      %s25 = sshll.u32 [#allocation3], 4
      %s26 = int_to_ptr.vmem [resolvable:$true] %s25
      %28 = dma.hbm_to_vmem [thread:$0]  %s24, 128, %s26, [#allocation4]
    $region5: #{tpu_custom_call.1} parent=1 // pred_fallthru
      _
    // Predicated region
    $region6: #{tpu_custom_call.1} parent=1 // pred_check
      _
    $region7: #{tpu_custom_call.1} parent=1 // pred_check_branch
      %30 = sbr.rel (0) target = $region9
    $region8: #{tpu_custom_call.1} parent=1 // pred_region
      %32 = vsyncadd [#allocation6], 0
      %s33 = sshll.u32 %s1, 4
      %s34 = int_to_ptr.hbm [resolvable:$true] %s33
      %s35 = sshll.u32 [#allocation5], 4
      %s36 = int_to_ptr.vmem [resolvable:$true] %s35
      %41 = dma.hbm_to_vmem [thread:$0]  %s34, 256, %s36, [#allocation6], 128, 128, 8
    $region9: #{tpu_custom_call.1} parent=1 // pred_fallthru
      _
    // Predicated region
    $region10: #{tpu_custom_call.1} parent=1 // pred_check
      _
    $region11: #{tpu_custom_call.1} parent=1 // pred_check_branch
      %43 = sbr.rel (0) target = $region13
    $region12: #{tpu_custom_call.1} parent=1 // pred_region
      _
    $region13: #{tpu_custom_call.1} parent=1 // pred_fallthru
      _
    // Predicated region
    $region14: #{tpu_custom_call.1} parent=1 // pred_check
      _
    $region15: #{tpu_custom_call.1} parent=1 // pred_check_branch
      %45 = sbr.rel (0) target = $region17
    $region16: #{tpu_custom_call.1} parent=1 // pred_region
      _
    $region17: #{tpu_custom_call.1} parent=1 // pred_fallthru
      _
    // Predicated region
    $region18: #{tpu_custom_call.1} parent=1 // pred_check
      _
    $region19: #{tpu_custom_call.1} parent=1 // pred_check_branch
      %47 = sbr.rel (0) target = $region21
    $region20: #{tpu_custom_call.1} parent=1 // pred_region
      _
    $region21: #{tpu_custom_call.1} parent=1 // pred_fallthru
      _
    // Predicated region
    $region22: #{tpu_custom_call.1} parent=1 // pred_check
      _
    $region23: #{tpu_custom_call.1} parent=1 // pred_check_branch
      %49 = sbr.rel (0) target = $region25
    $region24: #{tpu_custom_call.1} parent=1 // pred_region
      %51 = vsyncadd [#allocation6], 0
      %s52 = sshll.u32 %s5, 4
      %s53 = int_to_ptr.hbm [resolvable:$true] %s52
      %s54 = sshll.u32 [#allocation7], 4
      %s55 = int_to_ptr.vmem [resolvable:$true] %s54
      %60 = dma.hbm_to_vmem [thread:$0]  %s53, 512, %s55, [#allocation6], 128, 128, 8
    $region25: #{tpu_custom_call.1} parent=1 // pred_fallthru
      _
    // Predicated region
    $region26: #{tpu_custom_call.1} parent=1 // pred_check
      _
    $region27: #{tpu_custom_call.1} parent=1 // pred_check_branch
      %62 = sbr.rel (0) target = $region29
    $region28: #{tpu_custom_call.1} parent=1 // pred_region
      _
    $region29: #{tpu_custom_call.1} parent=1 // pred_fallthru
      _
    // Predicated region
    $region30: #{tpu_custom_call.1} parent=1 // pred_check
      _
    $region31: #{tpu_custom_call.1} parent=1 // pred_check_branch
      %64 = sbr.rel (0) target = $region33
    $region32: #{tpu_custom_call.1} parent=1 // pred_region
      _
    $region33: #{tpu_custom_call.1} parent=1 // pred_fallthru
      _
    // Predicated region
    $region34: #{tpu_custom_call.1} parent=1 // pred_check
      _
    $region35: #{tpu_custom_call.1} parent=1 // pred_check_branch
      %66 = sbr.rel (0) target = $region37
    $region36: #{tpu_custom_call.1} parent=1 // pred_region
      _
    $region37: #{tpu_custom_call.1} parent=1 // pred_fallthru
      _
    // Predicated region
    $region38: #{tpu_custom_call.1} parent=1 // pred_check
      _
    $region39: #{tpu_custom_call.1} parent=1 // pred_check_branch
      %68 = sbr.rel (0) target = $region41
    $region40: #{tpu_custom_call.1} parent=1 // pred_region
      %70 = dma.done [#allocation4], 128
    $region41: #{tpu_custom_call.1} parent=1 // pred_fallthru
      _
    // Predicated region
    $region42: #{tpu_custom_call.1} parent=1 // pred_check
      _
    $region43: #{tpu_custom_call.1} parent=1 // pred_check_branch
      %72 = sbr.rel (0) target = $region45
    $region44: #{tpu_custom_call.1} parent=1 // pred_region
      %74 = dma.done [#allocation6], 256
    $region45: #{tpu_custom_call.1} parent=1 // pred_fallthru
      _
    // Predicated region
    $region46: #{tpu_custom_call.1} parent=1 // pred_check
      _
    $region47: #{tpu_custom_call.1} parent=1 // pred_check_branch
      %76 = sbr.rel (0) target = $region49
    $region48: #{tpu_custom_call.1} parent=1 // pred_region
      %78 = dma.done [#allocation6], 512
    $region49: #{tpu_custom_call.1} parent=1 // pred_fallthru
      _
    %v79 = vld [vmem:[#allocation3] sm:$0xff]
    %v80 = vld [vmem:[#allocation5] sm:$0xff]
    %v81 = vld [vmem:[#allocation5 + $0x8] sm:$0xff]
    %v82 = vld [vmem:[%s2] sm:$0x1]
    %v84 = vperm.slane %v82, 0
    %vm86 = vcmask 130048
    %v88 = vsel %vm86, %v79, 0
    %90 = vmatpush.msra.mxu0 0.0
    %91 = vmatpush.msra.mxu0 0.0
    %92 = vmatpush.msra.mxu0 0.0
    %93 = vmatpush.msra.mxu0 0.0
    %94 = vmatpush.msra.mxu0 0.0
    %95 = vmatpush.msra.mxu0 0.0
    %96 = vmatpush.msra.mxu0 0.0
    %97 = vmatpush.msra.mxu0 0.0
    %98 = vmatpush.msra.mxu0 0.0
    %99 = vmatpush.msra.mxu0 0.0
    %100 = vmatpush.msra.mxu0 0.0
    %101 = vmatpush.msra.mxu0 0.0
    %102 = vmatpush.msra.mxu0 0.0
    %103 = vmatpush.msra.mxu0 0.0
    %104 = vmatpush.msra.mxu0 %v81
    %105 = vmatpush.msra.mxu0 %v80
    %106 = vmatmul.f32.gmra.mxu0 %v88
    %v107 = vpop.f32.mrf.mxu0
    %v108 = vadd.f32 %v84, %v107
    %109 = vdwg.mxu0
    %v110 = vmax.f32 %v108, 0.0
    %v111 = vld [vmem:[%s3] sm:$0xff]
    %v112 = vld [vmem:[%s3 + $0x8] sm:$0xff]
    %v113 = vld [vmem:[%s3 + $0x10] sm:$0xff]
    %v114 = vld [vmem:[%s3 + $0x18] sm:$0xff]
    %v115 = vld [vmem:[%s4] sm:$0x1]
    %v117 = vperm.slane %v115, 0
    %vm119 = vcmask 261120
    %v121 = vsel %vm119, %v110, 0
    %123 = vmatpush.msra.mxu0 0.0
    %124 = vmatpush.msra.mxu0 0.0
    %125 = vmatpush.msra.mxu0 0.0
    %126 = vmatpush.msra.mxu0 0.0
    %127 = vmatpush.msra.mxu0 0.0
    %128 = vmatpush.msra.mxu0 0.0
    %129 = vmatpush.msra.mxu0 0.0
    %130 = vmatpush.msra.mxu0 0.0
    %131 = vmatpush.msra.mxu0 0.0
    %132 = vmatpush.msra.mxu0 0.0
    %133 = vmatpush.msra.mxu0 0.0
    %134 = vmatpush.msra.mxu0 0.0
    %135 = vmatpush.msra.mxu0 %v114
    %136 = vmatpush.msra.mxu0 %v113
    %137 = vmatpush.msra.mxu0 %v112
    %138 = vmatpush.msra.mxu0 %v111
    %139 = vmatmul.f32.gmra.mxu0 %v121
    %v140 = vpop.f32.mrf.mxu0
    %v141 = vadd.f32 %v117, %v140
    %142 = vdwg.mxu0
    %v143 = vmax.f32 %v141, 0.0
    %v144 = vld [vmem:[#allocation7] sm:$0xff]
    %v145 = vld [vmem:[#allocation7 + $0x8] sm:$0xff]
    %v146 = vld [vmem:[#allocation7 + $0x10] sm:$0xff]
    %v147 = vld [vmem:[#allocation7 + $0x18] sm:$0xff]
    %v148 = vld [vmem:[%s6] sm:$0x1]
    %v150 = vperm.slane %v148, 0
    %v153 = vsel %vm119, %v143, 0
    %155 = vmatpush.msra.mxu0 0.0
    %156 = vmatpush.msra.mxu0 0.0
    %157 = vmatpush.msra.mxu0 0.0
    %158 = vmatpush.msra.mxu0 0.0
    %159 = vmatpush.msra.mxu0 0.0
    %160 = vmatpush.msra.mxu0 0.0
    %161 = vmatpush.msra.mxu0 0.0
    %162 = vmatpush.msra.mxu0 0.0
    %163 = vmatpush.msra.mxu0 0.0
    %164 = vmatpush.msra.mxu0 0.0
    %165 = vmatpush.msra.mxu0 0.0
    %166 = vmatpush.msra.mxu0 0.0
    %167 = vmatpush.msra.mxu0 %v147
    %168 = vmatpush.msra.mxu0 %v146
    %169 = vmatpush.msra.mxu0 %v145
    %170 = vmatpush.msra.mxu0 %v144
    %171 = vmatmul.f32.gmra.mxu0 %v153
    %v172 = vpop.f32.mrf.mxu0
    %v173 = vadd.f32 %v150, %v172
    %174 = vdwg.mxu0
    %v175 = vmax.f32 %v173, 0.0
    %v176 = vld [vmem:[%s7] sm:$0xff]
    %v177 = vld [vmem:[%s7 + $0x8] sm:$0xff]
    %v178 = vld [vmem:[%s7 + $0x10] sm:$0xff]
    %v179 = vld [vmem:[%s7 + $0x18] sm:$0xff]
    %v180 = vld [vmem:[#allocation2] sm:$0x1]
    %v182 = vperm.slane %v180, 0
    %v185 = vsel %vm119, %v175, 0
    %187 = vmatpush.msra.mxu0 0.0
    %188 = vmatpush.msra.mxu0 0.0
    %189 = vmatpush.msra.mxu0 0.0
    %190 = vmatpush.msra.mxu0 0.0
    %191 = vmatpush.msra.mxu0 0.0
    %192 = vmatpush.msra.mxu0 0.0
    %193 = vmatpush.msra.mxu0 0.0
    %194 = vmatpush.msra.mxu0 0.0
    %195 = vmatpush.msra.mxu0 0.0
    %196 = vmatpush.msra.mxu0 0.0
    %197 = vmatpush.msra.mxu0 0.0
    %198 = vmatpush.msra.mxu0 0.0
    %199 = vmatpush.msra.mxu0 %v179
    %200 = vmatpush.msra.mxu0 %v178
    %201 = vmatpush.msra.mxu0 %v177
    %202 = vmatpush.msra.mxu0 %v176
    %203 = vmatmul.f32.gmra.mxu0 %v185
    %v204 = vpop.f32.mrf.mxu0
    %v205 = vadd.f32 %v182, %v204
    %206 = vdwg.mxu0
    %vm207 = vcmask 7168
    %208 = vst.msk [vmem:[%s9] sm:$0xff] %vm207, %v205
    // Predicated region
    $region50: #{tpu_custom_call.1} parent=1 // pred_check
      _
    $region51: #{tpu_custom_call.1} parent=1 // pred_check_branch
      %210 = sbr.rel (0) target = $region53
    $region52: #{tpu_custom_call.1} parent=1 // pred_region
      _
    $region53: #{tpu_custom_call.1} parent=1 // pred_fallthru
      _
    // Predicated region
    $region54: #{tpu_custom_call.1} parent=1 // pred_check
      _
    $region55: #{tpu_custom_call.1} parent=1 // pred_check_branch
      %212 = sbr.rel (0) target = $region57
    $region56: #{tpu_custom_call.1} parent=1 // pred_region
      _
    $region57: #{tpu_custom_call.1} parent=1 // pred_fallthru
      _
    %213 = vsyncpa [#allocation4], 1
    %214 = vsyncpa [#allocation6], 1

</llo_original>
